<compile_context>
chip_gen: v5e
topology: v5e:2x2
jax: 0.10.0
libtpu: 0.0.40
codegen_flags: <defaults>
</compile_context>

<pallas_src>
import jax
import jax.numpy as jnp
from jax.experimental import pallas as pl
from jax.experimental.pallas import tpu as pltpu

START_IDX = (0, 10, 20, 30, 40, 50, 60, 70, 80, 86)   # all even -> blocked T indexing with F_BLK=2
CLIP_LEN = 16
N_CLIPS = len(START_IDX)
F_BLK = 2            # frames per grid step (gcd of all start offsets and CLIP_LEN)
HIDDEN = 32          # synthetic backbone hidden width
FEAT_DIM = 64        # synthetic I3D feature / logits dimension (get_feature_dim())


def backbone_pooled_features(start_blk, x_video, w1t, b1):
    """Per-clip pooled hidden features.

    start_blk: (N_CLIPS,) int32 = clip start frame // F_BLK   (scalar-prefetched to SMEM)
    x_video:   (B, T, C, H*W) bf16, spatial positions lane-dense
    w1t:       (HIDDEN, C) f32 transposed 1x1x1-conv weight
    b1:        (HIDDEN, 1) f32 bias
    returns    (B, N_CLIPS, HIDDEN, 1) f32 = mean over the clip's CLIP_LEN*H*W positions of
               relu(w1t @ x + b1).
    """
    B, T, C, hw = x_video.shape
    hidden = w1t.shape[0]
    n_clips = start_blk.shape[0]
    nf = CLIP_LEN // F_BLK
    inv_count = 1.0 / float(CLIP_LEN * hw)

    def kernel(s_ref, x_ref, w_ref, b_ref, o_ref):
        f = pl.program_id(2)

        @pl.when(f == 0)
        def _init():
            o_ref[...] = jnp.zeros_like(o_ref)

        w = w_ref[...]                                   # (HIDDEN, C)
        b = b_ref[...]                                   # (HIDDEN, 1)
        acc = jnp.zeros((hidden, 1), jnp.float32)
        for fi in range(F_BLK):                          # static unroll: 2 frames per grid step
            xs = x_ref[0, fi].astype(jnp.float32)        # (C, hw), hw lane-dense
            # 1x1x1 conv == C broadcast multiply-adds on the VPU (keeps positions in lanes)
            h = b + w[:, 0:1] * xs[0:1, :]
            for c in range(1, C):
                h = h + w[:, c:c + 1] * xs[c:c + 1, :]
            h = jnp.maximum(h, 0.0)                      # ReLU
            acc = acc + jnp.sum(h, axis=1, keepdims=True)  # partial spatial sum (XLU reduce)
        o_ref[...] = o_ref[...] + acc[None, None]        # accumulate pooled sum (resident block)

        @pl.when(f == pl.num_programs(2) - 1)
        def _finalize():
            o_ref[...] = o_ref[...] * inv_count          # sum -> mean over clip positions

    return pl.pallas_call(
        kernel,
        out_shape=jax.ShapeDtypeStruct((B, n_clips, hidden, 1), jnp.float32),
        grid_spec=pltpu.PrefetchScalarGridSpec(
            num_scalar_prefetch=1,
            grid=(B, n_clips, nf),
            in_specs=[
                # clip window sliced straight out of the original video by the BlockSpec DMA;
                # T-block index = start_idx[clip]//F_BLK + frame_chunk
                pl.BlockSpec((1, F_BLK, C, hw), lambda b, c, f, s: (b, s[c] + f, 0, 0)),
                pl.BlockSpec((hidden, C), lambda b, c, f, s: (0, 0)),
                pl.BlockSpec((hidden, 1), lambda b, c, f, s: (0, 0)),
            ],
            out_specs=pl.BlockSpec((1, 1, hidden, 1), lambda b, c, f, s: (b, c, 0, 0)),
        ),
        compiler_params=pltpu.CompilerParams(
            dimension_semantics=("parallel", "parallel", "arbitrary")),
    )(start_blk, x_video, w1t, b1)


def i3d_backbone_forward(target, params, gap=True):
    """Mirrors I3D_backbone.forward. target: (B, C, T, H, W)."""
    B, C, T, H, W = target.shape
    assert T >= START_IDX[-1] + CLIP_LEN, "need at least 102 frames"
    hw = H * W
    # Single relayout of the ORIGINAL video (no 10-clip duplication, no channel zero-pad):
    # (B, C, T, H, W) -> (B, T, C, H*W), cast to bf16 to halve HBM read traffic.
    x_video = jnp.transpose(target.reshape(B, C, T, hw), (0, 2, 1, 3)).astype(jnp.bfloat16)
    if T % F_BLK:                                   # keep T divisible by the frame block
        x_video = jnp.pad(x_video, ((0, 0), (0, F_BLK - T % F_BLK), (0, 0), (0, 0)))
    start_blk = jnp.asarray(START_IDX, jnp.int32) // F_BLK

    pooled = backbone_pooled_features(start_blk, x_video,
                                      params["w1t"], params["b1"])   # (B, 10, HIDDEN, 1)
    pooled = pooled[..., 0]                                          # (B, 10, HIDDEN)
    # reference's .reshape(10, B, -1).transpose(0, 1) already realized as (batch, clip, feat)
    if gap:
        pooled = pooled.mean(axis=1)                                 # (B, HIDDEN)
    # Final affine head hoisted past the clip mean (affine commutes with mean -> exact).
    return pooled @ params["w2"] + params["b2"]


def init_params(key, in_channels=3, hidden=HIDDEN, feat_dim=FEAT_DIM):
    k1, k2, k3, k4 = jax.random.split(key, 4)
    w1t = jax.random.normal(k1, (hidden, in_channels), jnp.float32) * 0.1   # transposed 1x1x1 conv
    b1 = jax.random.normal(k2, (hidden, 1), jnp.float32) * 0.01
    w2 = jax.random.normal(k3, (hidden, feat_dim), jnp.float32) * 0.1
    b2 = jax.random.normal(k4, (feat_dim,), jnp.float32) * 0.01
    return dict(w1t=w1t, b1=b1, w2=w2, b2=b2)


def _reference_forward(target, params, gap=True):
    """Pure-JAX reference (same bf16 input quantization as the kernel path)."""
    B, C, T, H, W = target.shape
    tq = target.astype(jnp.bfloat16).astype(jnp.float32)
    clips = jnp.stack([tq[:, :, i:i + CLIP_LEN] for i in START_IDX], axis=1)  # (B,10,C,16,H,W)
    xr = jnp.transpose(clips, (0, 1, 3, 4, 5, 2)).reshape(B, N_CLIPS, -1, C)  # (B,10,S,C)
    hr = jnp.maximum(jnp.einsum("bnsc,dc->bnsd", xr, params["w1t"]) + params["b1"][:, 0], 0.0)
    pr = hr.mean(axis=2)                                                      # (B,10,HIDDEN)
    if gap:
        pr = pr.mean(axis=1)                                                  # (B,HIDDEN)
    return pr @ params["w2"] + params["b2"]


if __name__ == "__main__":
    key = jax.random.PRNGKey(0)
    kx, kp = jax.random.split(key)
    # Small shapes: batch=2, RGB video, 102 frames (minimum for start_idx[-1]+16), 8x8 spatial.
    B, C, T, H, W = 2, 3, 102, 8, 8
    target = jax.random.normal(kx, (B, C, T, H, W), dtype=jnp.float32)
    params = init_params(kp)

    out = jax.block_until_ready(i3d_backbone_forward(target, params, gap=True))
    assert out.shape == (B, FEAT_DIM), out.shape
    assert jnp.all(jnp.isfinite(out))

    ref = _reference_forward(target, params, gap=True)
    assert jnp.allclose(out, ref, rtol=1e-3, atol=1e-3), float(jnp.max(jnp.abs(out - ref)))
    print("KERNEL_OK")
</pallas_src>

<mosaic_0001>
module attributes {stable_mosaic.version = 11 : i64} {
  func.func @kernel(%arg0: i32, %arg1: i32, %arg2: i32, %arg3: memref<10xi32, #tpu.memory_space<smem>>, %arg4: memref<1x2x3x64xbf16, #tpu.memory_space<vmem>>, %arg5: memref<32x3xf32, #tpu.memory_space<vmem>>, %arg6: memref<32x1xf32, #tpu.memory_space<vmem>>, %arg7: memref<1x1x32x1xf32, #tpu.memory_space<vmem>>) attributes {dimension_semantics = [#tpu.dimension_semantics<parallel>, #tpu.dimension_semantics<parallel>, #tpu.dimension_semantics<arbitrary>], iteration_bounds = array<i64: 2, 10, 8>, scalar_prefetch = 1 : i64, scratch_operands = 0 : i64, tpu.core_type = #tpu.core_type<tc>, window_params = [{transform_indices = @transform_0, window_bounds = array<i64: 1, 2, 3, 64>}, {pipeline_mode = #tpu.pipeline_mode<synchronous>, transform_indices = @transform_1, window_bounds = array<i64: 32, 3>}, {pipeline_mode = #tpu.pipeline_mode<synchronous>, transform_indices = @transform_2, window_bounds = array<i64: 32, 1>}, {transform_indices = @transform_3, window_bounds = array<i64: 1, 1, 32, 1>}]} {
    %c0_i32 = arith.constant 0 : i32
    %0 = arith.cmpi eq, %arg2, %c0_i32 : i32
    %1 = arith.extui %0 : i1 to i32
    %c0_i32_0 = arith.constant 0 : i32
    %2 = arith.cmpi ne, %1, %c0_i32_0 : i32
    scf.if %2 {
      %cst_24 = arith.constant 0.000000e+00 : f32
      %67 = vector.broadcast %cst_24 : f32 to vector<1x1x32x1xf32>
      %c0_25 = arith.constant 0 : index
      %c0_26 = arith.constant 0 : index
      %c0_27 = arith.constant 0 : index
      %c0_28 = arith.constant 0 : index
      %68 = vector.load %arg7[%c0_25, %c0_26, %c0_27, %c0_28] : memref<1x1x32x1xf32, #tpu.memory_space<vmem>>, vector<1x1x32x1xf32>
      tpu.vector_store %arg7[%c0_25, %c0_26, %c0_27, %c0_28], %67 {strides = array<i32>} : memref<1x1x32x1xf32, #tpu.memory_space<vmem>>, vector<1x1x32x1xf32>,
    } else {
    }
    %c0 = arith.constant 0 : index
    %c0_1 = arith.constant 0 : index
    %3 = vector.load %arg5[%c0, %c0_1] : memref<32x3xf32, #tpu.memory_space<vmem>>, vector<32x3xf32>
    %c0_2 = arith.constant 0 : index
    %c0_3 = arith.constant 0 : index
    %4 = vector.load %arg6[%c0_2, %c0_3] : memref<32x1xf32, #tpu.memory_space<vmem>>, vector<32x1xf32>
    %cst = arith.constant 0.000000e+00 : f32
    %5 = vector.broadcast %cst : f32 to vector<32x1xf32>
    %c0_4 = arith.constant 0 : index
    %c0_5 = arith.constant 0 : index
    %c0_6 = arith.constant 0 : index
    %c0_7 = arith.constant 0 : index
    %6 = vector.load %arg4[%c0_4, %c0_5, %c0_6, %c0_7] : memref<1x2x3x64xbf16, #tpu.memory_space<vmem>>, vector<1x1x3x64xbf16>
    %7 = vector.shape_cast %6 : vector<1x1x3x64xbf16> to vector<3x64xbf16>
    %8 = arith.extf %7 : vector<3x64xbf16> to vector<3x64xf32>
    %9 = vector.extract_strided_slice %3 {offsets = [0, 0], sizes = [32, 1], strides = [1, 1]} : vector<32x3xf32> to vector<32x1xf32>
    %10 = vector.extract_strided_slice %8 {offsets = [0, 0], sizes = [1, 64], strides = [1, 1]} : vector<3x64xf32> to vector<1x64xf32>
    %11 = vector.broadcast %9 : vector<32x1xf32> to vector<32x64xf32>
    %12 = vector.broadcast %10 : vector<1x64xf32> to vector<32x64xf32>
    %13 = arith.mulf %11, %12 : vector<32x64xf32>
    %14 = vector.broadcast %4 : vector<32x1xf32> to vector<32x64xf32>
    %15 = arith.addf %14, %13 : vector<32x64xf32>
    %16 = vector.extract_strided_slice %3 {offsets = [0, 1], sizes = [32, 1], strides = [1, 1]} : vector<32x3xf32> to vector<32x1xf32>
    %17 = vector.extract_strided_slice %8 {offsets = [1, 0], sizes = [1, 64], strides = [1, 1]} : vector<3x64xf32> to vector<1x64xf32>
    %18 = vector.broadcast %16 : vector<32x1xf32> to vector<32x64xf32>
    %19 = vector.broadcast %17 : vector<1x64xf32> to vector<32x64xf32>
    %20 = arith.mulf %18, %19 : vector<32x64xf32>
    %21 = arith.addf %15, %20 : vector<32x64xf32>
    %22 = vector.extract_strided_slice %3 {offsets = [0, 2], sizes = [32, 1], strides = [1, 1]} : vector<32x3xf32> to vector<32x1xf32>
    %23 = vector.extract_strided_slice %8 {offsets = [2, 0], sizes = [1, 64], strides = [1, 1]} : vector<3x64xf32> to vector<1x64xf32>
    %24 = vector.broadcast %22 : vector<32x1xf32> to vector<32x64xf32>
    %25 = vector.broadcast %23 : vector<1x64xf32> to vector<32x64xf32>
    %26 = arith.mulf %24, %25 : vector<32x64xf32>
    %27 = arith.addf %21, %26 : vector<32x64xf32>
    %cst_8 = arith.constant 0.000000e+00 : f32
    %28 = vector.broadcast %cst_8 : f32 to vector<32x64xf32>
    %29 = arith.maximumf %27, %28 : vector<32x64xf32>
    %cst_9 = arith.constant dense<0.000000e+00> : vector<32xf32>
    %30 = vector.multi_reduction <add>, %29, %cst_9 [1] : vector<32x64xf32> to vector<32xf32>
    %31 = vector.shape_cast %30 : vector<32xf32> to vector<32x1xf32>
    %32 = arith.addf %5, %31 : vector<32x1xf32>
    %c0_10 = arith.constant 0 : index
    %c1 = arith.constant 1 : index
    %c0_11 = arith.constant 0 : index
    %c0_12 = arith.constant 0 : index
    %33 = vector.load %arg4[%c0_10, %c1, %c0_11, %c0_12] : memref<1x2x3x64xbf16, #tpu.memory_space<vmem>>, vector<1x1x3x64xbf16>
    %34 = vector.shape_cast %33 : vector<1x1x3x64xbf16> to vector<3x64xbf16>
    %35 = arith.extf %34 : vector<3x64xbf16> to vector<3x64xf32>
    %36 = vector.extract_strided_slice %3 {offsets = [0, 0], sizes = [32, 1], strides = [1, 1]} : vector<32x3xf32> to vector<32x1xf32>
    %37 = vector.extract_strided_slice %35 {offsets = [0, 0], sizes = [1, 64], strides = [1, 1]} : vector<3x64xf32> to vector<1x64xf32>
    %38 = vector.broadcast %36 : vector<32x1xf32> to vector<32x64xf32>
    %39 = vector.broadcast %37 : vector<1x64xf32> to vector<32x64xf32>
    %40 = arith.mulf %38, %39 : vector<32x64xf32>
    %41 = vector.broadcast %4 : vector<32x1xf32> to vector<32x64xf32>
    %42 = arith.addf %41, %40 : vector<32x64xf32>
    %43 = vector.extract_strided_slice %3 {offsets = [0, 1], sizes = [32, 1], strides = [1, 1]} : vector<32x3xf32> to vector<32x1xf32>
    %44 = vector.extract_strided_slice %35 {offsets = [1, 0], sizes = [1, 64], strides = [1, 1]} : vector<3x64xf32> to vector<1x64xf32>
    %45 = vector.broadcast %43 : vector<32x1xf32> to vector<32x64xf32>
    %46 = vector.broadcast %44 : vector<1x64xf32> to vector<32x64xf32>
    %47 = arith.mulf %45, %46 : vector<32x64xf32>
    %48 = arith.addf %42, %47 : vector<32x64xf32>
    %49 = vector.extract_strided_slice %3 {offsets = [0, 2], sizes = [32, 1], strides = [1, 1]} : vector<32x3xf32> to vector<32x1xf32>
    %50 = vector.extract_strided_slice %35 {offsets = [2, 0], sizes = [1, 64], strides = [1, 1]} : vector<3x64xf32> to vector<1x64xf32>
    %51 = vector.broadcast %49 : vector<32x1xf32> to vector<32x64xf32>
    %52 = vector.broadcast %50 : vector<1x64xf32> to vector<32x64xf32>
    %53 = arith.mulf %51, %52 : vector<32x64xf32>
    %54 = arith.addf %48, %53 : vector<32x64xf32>
    %cst_13 = arith.constant 0.000000e+00 : f32
    %55 = vector.broadcast %cst_13 : f32 to vector<32x64xf32>
    %56 = arith.maximumf %54, %55 : vector<32x64xf32>
    %cst_14 = arith.constant dense<0.000000e+00> : vector<32xf32>
    %57 = vector.multi_reduction <add>, %56, %cst_14 [1] : vector<32x64xf32> to vector<32xf32>
    %58 = vector.shape_cast %57 : vector<32xf32> to vector<32x1xf32>
    %59 = arith.addf %32, %58 : vector<32x1xf32>
    %c0_15 = arith.constant 0 : index
    %c0_16 = arith.constant 0 : index
    %c0_17 = arith.constant 0 : index
    %c0_18 = arith.constant 0 : index
    %60 = vector.load %arg7[%c0_15, %c0_16, %c0_17, %c0_18] : memref<1x1x32x1xf32, #tpu.memory_space<vmem>>, vector<1x1x32x1xf32>
    %61 = vector.shape_cast %59 : vector<32x1xf32> to vector<1x1x32x1xf32>
    %62 = arith.addf %60, %61 : vector<1x1x32x1xf32>
    %c0_19 = arith.constant 0 : index
    %c0_20 = arith.constant 0 : index
    %c0_21 = arith.constant 0 : index
    %c0_22 = arith.constant 0 : index
    %63 = vector.load %arg7[%c0_19, %c0_20, %c0_21, %c0_22] : memref<1x1x32x1xf32, #tpu.memory_space<vmem>>, vector<1x1x32x1xf32>
    tpu.vector_store %arg7[%c0_19, %c0_20, %c0_21, %c0_22], %62 {strides = array<i32>} : memref<1x1x32x1xf32, #tpu.memory_space<vmem>>, vector<1x1x32x1xf32>,
    %c7_i32 = arith.constant 7 : i32
    %64 = arith.cmpi eq, %arg2, %c7_i32 : i32
    %65 = arith.extui %64 : i1 to i32
    %c0_i32_23 = arith.constant 0 : i32
    %66 = arith.cmpi ne, %65, %c0_i32_23 : i32
    scf.if %66 {
      %c0_24 = arith.constant 0 : index
      %c0_25 = arith.constant 0 : index
      %c0_26 = arith.constant 0 : index
      %c0_27 = arith.constant 0 : index
      %67 = vector.load %arg7[%c0_24, %c0_25, %c0_26, %c0_27] : memref<1x1x32x1xf32, #tpu.memory_space<vmem>>, vector<1x1x32x1xf32>
      %cst_28 = arith.constant 9.765625E-4 : f32
      %68 = vector.broadcast %cst_28 : f32 to vector<1x1x32x1xf32>
      %69 = arith.mulf %67, %68 : vector<1x1x32x1xf32>
      %c0_29 = arith.constant 0 : index
      %c0_30 = arith.constant 0 : index
      %c0_31 = arith.constant 0 : index
      %c0_32 = arith.constant 0 : index
      %70 = vector.load %arg7[%c0_29, %c0_30, %c0_31, %c0_32] : memref<1x1x32x1xf32, #tpu.memory_space<vmem>>, vector<1x1x32x1xf32>
      tpu.vector_store %arg7[%c0_29, %c0_30, %c0_31, %c0_32], %69 {strides = array<i32>} : memref<1x1x32x1xf32, #tpu.memory_space<vmem>>, vector<1x1x32x1xf32>,
    } else {
    }
    return
  }
  func.func @transform_0(%arg0: i32, %arg1: i32, %arg2: i32, %arg3: memref<10xi32, #tpu.memory_space<smem>>) -> (i32, i32, i32, i32) {
    %0 = arith.index_cast %arg1 : i32 to index
    %1 = memref.load %arg3[%0] : memref<10xi32, #tpu.memory_space<smem>>
    %2 = arith.addi %1, %arg2 : i32
    %c0_i32 = arith.constant 0 : i32
    %c0_i32_0 = arith.constant 0 : i32
    %c0_i32_1 = arith.constant 0 : i32
    return %arg0, %2, %c0_i32, %c0_i32_0 : i32, i32, i32, i32
  }
  func.func @transform_1(%arg0: i32, %arg1: i32, %arg2: i32, %arg3: memref<10xi32, #tpu.memory_space<smem>>) -> (i32, i32) {
    %c0_i32 = arith.constant 0 : i32
    %c0_i32_0 = arith.constant 0 : i32
    %c0_i32_1 = arith.constant 0 : i32
    return %c0_i32, %c0_i32_0 : i32, i32
  }
  func.func @transform_2(%arg0: i32, %arg1: i32, %arg2: i32, %arg3: memref<10xi32, #tpu.memory_space<smem>>) -> (i32, i32) {
    %c0_i32 = arith.constant 0 : i32
    %c0_i32_0 = arith.constant 0 : i32
    %c0_i32_1 = arith.constant 0 : i32
    return %c0_i32, %c0_i32_0 : i32, i32
  }
  func.func @transform_3(%arg0: i32, %arg1: i32, %arg2: i32, %arg3: memref<10xi32, #tpu.memory_space<smem>>) -> (i32, i32, i32, i32) {
    %c0_i32 = arith.constant 0 : i32
    %c0_i32_0 = arith.constant 0 : i32
    %c0_i32_1 = arith.constant 0 : i32
    return %arg0, %arg1, %c0_i32, %c0_i32_0 : i32, i32, i32, i32
  }
}

</mosaic_0001>

<llo_original>
// kernel: tpu_custom_call.1
$region0: #{tpu_custom_call.1}
  #allocation0 [shape = 'u32[]', space=smem, size = 0x4, offset = 0x4, fixed_abs, tag = 'smem constant byte address 0x4 - core index']
  #allocation1 [shape = 'u32[72,128]{1,0:T(1,128)}', space=vmem, size = 0x9000, scoped, tag = 'internal scratch']
  #allocation2 [shape = 's32[1]{0}', space=sflag, size = 0x4, scoped, tag = 'scoped memory for tpu_custom_call.1']
  #allocation3 [shape = 'u8[512]{0}', space=smem, size = 0x200, scoped, tag = 'prefetched SMEM operand 0']
  %s0 = inlined_call_operand.vmem [shape: s32[10], index: 0, kind: input, shape index: {}]
  %s1 = inlined_call_operand.vmem [shape: bf16[2,102,3,64], index: 1, kind: input, shape index: {}]
  %s2 = inlined_call_operand.vmem [shape: f32[32,3], index: 2, kind: input, shape index: {}]
  %s3 = inlined_call_operand.vmem [shape: f32[32,1], index: 3, kind: input, shape index: {}]
  %s4 = inlined_call_operand.vmem [shape: f32[2,10,32,1], index: 4, kind: output, shape index: {}]
  %s5 = sld [smem:[#allocation0]]
  $region53: #{tpu_custom_call.1} parent=0
    _
  %s7 = ssub.s32 1, %s5
  %s8 = scalar_select 0, %s7, %s5
  %s10 = sshll.u32 %s0, 4
  %s11 = int_to_ptr.vmem [resolvable:$true] %s10
  %13 = dma.vmem_to_smem %s11, 16, [#allocation3], [#allocation2]
  %15 = dma.done [#allocation2], 16
  %16 = sfence
  loop: start=0, step=1, limit=162
  $region2: #{tpu_custom_call.1} parent=0 // loop_pre_header
    _
  $region3: #{tpu_custom_call.1} parent=0 // loop_header
    %s18 = sphi 0, %s22
    %p19 = scmp.ge.s32.totalorder %s18, 162
    %s25 = sphi 0, %s44
    %s26 = sphi 0, %s40
    %s27 = sphi 0, %s36
    %s28 = sphi 0, %s25
    %s29 = sphi 0, %s26
    %s30 = sphi 0, %s27
    %s31 = sphi 0, %s28
    %s32 = sphi 0, %s29
    %s33 = sphi 0, %s30
    %s53 = sphi 0, %s55
    %s56 = sphi 0, %s53
    %s57 = sphi 0, %s56
    %s73 = sphi 0, %s57
    %s77 = sphi 0, %s77
    %s79 = sphi 0, %s77
    %s80 = sphi 0, %s79
    %s94 = sphi 0, %s80
    %s98 = sphi 0, %s98
    %s100 = sphi 0, %s98
    %s101 = sphi 0, %s100
    %s115 = sphi 0, %s101
    %s123 = sphi 0, %s125
    %s126 = sphi 0, %s123
    %s127 = sphi 0, %s126
    %s143 = sphi 0, %s127
  $region4: #{tpu_custom_call.1} parent=0 // loop_header_branch
    %21 = sbr.rel (%p19) target = $region8
  $region5: #{tpu_custom_call.1} parent=0 // loop_body
    %s23 = ssub.s32 %s18, 1
    %s24 = ssub.s32 %s18, 2
    %s34 = sadd.s32 1, %s27
    %p35 = scmp.ge.s32.totalorder %s34, 8
    %s36 = scalar_select %p35, 0, %s34
    %s37 = sadd.s32 1, %s26
    %s38 = scalar_select %p35, %s37, %s26
    %p39 = scmp.ge.s32.totalorder %s38, 10
    %s40 = scalar_select %p39, 0, %s38
    %s41 = sadd.s32 1, %s25
    %s42 = scalar_select %p39, %s41, %s25
    %p43 = scmp.ge.s32.totalorder %s42, 2
    %s44 = scalar_select %p43, 0, %s42
    %s45 = sld [smem:[#allocation3 + %s26]]
    %s46 = sadd.s32 %s45, %s27
    %s47 = sld [smem:[#allocation3 + %s40]]
    %s48 = sadd.s32 %s47, %s36
    %s49 = ssub.s32 %s25, %s44
    %s50 = ssub.s32 %s46, %s48
    %s51 = sor.u32 %s49, %s50
    %p52 = scmp.eq.s32.totalorder %s51, 0
    %s54 = sadd.s32 %s53, 1
    %s55 = scalar_select %p52, %s53, %s54
    %p58 = pneg %p52
    %p59 = scmp.eq.s32.totalorder %s18, 159
    %p60 = por %p58, %p59
    %p61 = scmp.ne.s32.totalorder %s53, %s56
    %p62 = scmp.eq.s32.totalorder %s18, 0
    %p63 = por %p61, %p62
    %p64 = scmp.ne.s32.totalorder %s53, %s56
    %p65 = scmp.eq.s32.totalorder %s23, 159
    %p66 = por %p64, %p65
    %p67 = scmp.ne.s32.totalorder %s56, %s57
    %p68 = scmp.eq.s32.totalorder %s23, 0
    %p69 = por %p67, %p68
    %p70 = scmp.ne.s32.totalorder %s56, %s57
    %p71 = scmp.eq.s32.totalorder %s24, 159
    %p72 = por %p70, %p71
    %p74 = scmp.ne.s32.totalorder %s57, %s73
    %p75 = scmp.eq.s32.totalorder %s24, 0
    %p76 = por %p74, %p75
    %s78 = sadd.s32 %s77, 1
    %p81 = scmp.eq.s32.totalorder %s18, 159
    %p82 = scmp.ne.s32.totalorder %s77, %s79
    %p83 = scmp.eq.s32.totalorder %s18, 0
    %p84 = por %p82, %p83
    %p85 = scmp.ne.s32.totalorder %s77, %s79
    %p86 = scmp.eq.s32.totalorder %s23, 159
    %p87 = por %p85, %p86
    %p88 = scmp.ne.s32.totalorder %s79, %s80
    %p89 = scmp.eq.s32.totalorder %s23, 0
    %p90 = por %p88, %p89
    %p91 = scmp.ne.s32.totalorder %s79, %s80
    %p92 = scmp.eq.s32.totalorder %s24, 159
    %p93 = por %p91, %p92
    %p95 = scmp.ne.s32.totalorder %s80, %s94
    %p96 = scmp.eq.s32.totalorder %s24, 0
    %p97 = por %p95, %p96
    %s99 = sadd.s32 %s98, 1
    %p102 = scmp.eq.s32.totalorder %s18, 159
    %p103 = scmp.ne.s32.totalorder %s98, %s100
    %p104 = scmp.eq.s32.totalorder %s18, 0
    %p105 = por %p103, %p104
    %p106 = scmp.ne.s32.totalorder %s98, %s100
    %p107 = scmp.eq.s32.totalorder %s23, 159
    %p108 = por %p106, %p107
    %p109 = scmp.ne.s32.totalorder %s100, %s101
    %p110 = scmp.eq.s32.totalorder %s23, 0
    %p111 = por %p109, %p110
    %p112 = scmp.ne.s32.totalorder %s100, %s101
    %p113 = scmp.eq.s32.totalorder %s24, 159
    %p114 = por %p112, %p113
    %p116 = scmp.ne.s32.totalorder %s101, %s115
    %p117 = scmp.eq.s32.totalorder %s24, 0
    %p118 = por %p116, %p117
    %s119 = ssub.s32 %s25, %s44
    %s120 = ssub.s32 %s26, %s40
    %s121 = sor.u32 %s119, %s120
    %p122 = scmp.eq.s32.totalorder %s121, 0
    %s124 = sadd.s32 %s123, 1
    %s125 = scalar_select %p122, %s123, %s124
    %p128 = pneg %p122
    %p129 = scmp.eq.s32.totalorder %s18, 159
    %p130 = por %p128, %p129
    %p131 = scmp.ne.s32.totalorder %s123, %s126
    %p132 = scmp.eq.s32.totalorder %s18, 0
    %p133 = por %p131, %p132
    %p134 = scmp.ne.s32.totalorder %s123, %s126
    %p135 = scmp.eq.s32.totalorder %s23, 159
    %p136 = por %p134, %p135
    %p137 = scmp.ne.s32.totalorder %s126, %s127
    %p138 = scmp.eq.s32.totalorder %s23, 0
    %p139 = por %p137, %p138
    %p140 = scmp.ne.s32.totalorder %s126, %s127
    %p141 = scmp.eq.s32.totalorder %s24, 159
    %p142 = por %p140, %p141
    %p144 = scmp.ne.s32.totalorder %s127, %s143
    %p145 = scmp.eq.s32.totalorder %s24, 0
    %p146 = por %p144, %p145
    %p147 = scmp.le.s32.totalorder 1, %s18
    %p148 = scmp.lt.s32.totalorder %s18, 161
    %p149 = pnand %p147, %p148
    %p150 = pneg %p149
    // Predicated region
    $region9: #{tpu_custom_call.1} parent=5 // pred_check
      _
    $region10: #{tpu_custom_call.1} parent=5 // pred_check_branch
      %152 = sbr.rel (%p149) target = $region12
    $region11: #{tpu_custom_call.1} parent=5 // pred_region
      %s153 = ssub.s32 %s18, 1
      // Predicated region
      $region13: #{tpu_custom_call.1} parent=11 // pred_check
        %p154 = pneg %p90
      $region14: #{tpu_custom_call.1} parent=11 // pred_check_branch
        %156 = sbr.rel (%p154) target = $region16
      $region15: #{tpu_custom_call.1} parent=11 // pred_region
        _
      $region16: #{tpu_custom_call.1} parent=11 // pred_fallthru
        _
      // Predicated region
      $region17: #{tpu_custom_call.1} parent=11 // pred_check
        %p157 = pneg %p111
      $region18: #{tpu_custom_call.1} parent=11 // pred_check_branch
        %159 = sbr.rel (%p157) target = $region20
      $region19: #{tpu_custom_call.1} parent=11 // pred_region
        _
      $region20: #{tpu_custom_call.1} parent=11 // pred_fallthru
        _
    $region12: #{tpu_custom_call.1} parent=5 // pred_fallthru
      _
    %p160 = scmp.lt.s32.totalorder %s18, 160
    // Predicated region
    $region21: #{tpu_custom_call.1} parent=5 // pred_check
      %p161 = pneg %p160
    $region22: #{tpu_custom_call.1} parent=5 // pred_check_branch
      %163 = sbr.rel (%p161) target = $region24
    $region23: #{tpu_custom_call.1} parent=5 // pred_region
      // Predicated region
      $region25: #{tpu_custom_call.1} parent=23 // pred_check
        %p164 = pneg %p63
      $region26: #{tpu_custom_call.1} parent=23 // pred_check_branch
        %166 = sbr.rel (%p164) target = $region28
      $region27: #{tpu_custom_call.1} parent=23 // pred_region
        %s167 = sld [smem:[#allocation3 + %s26]]
        %s168 = sadd.s32 %s167, %s27
        %s169 = smul.u32 2, %s168
        %p170 = scmp.lt.s32.totalorder %s25, 1
        %s171 = scalar_select %p170, %s25, 1
        %p172 = scmp.lt.s32.totalorder %s169, 101
        %s173 = scalar_select %p172, %s169, 101
        %s174 = smul.addr %s171, 102
        %s175 = sadd.s32 %s173, %s174
        %s176 = smul.addr %s175, 2
        %s177 = scalar_lea.vmem %s1, %s176
        %s178 = sld [smem:[#allocation3 + %s26]]
        %s179 = sadd.s32 %s178, %s27
        %s180 = smul.u32 2, %s179
      $region28: #{tpu_custom_call.1} parent=23 // pred_fallthru
        _
    $region24: #{tpu_custom_call.1} parent=5 // pred_fallthru
      _
    %p181 = scmp.le.s32.totalorder 1, %s18
    %p182 = scmp.lt.s32.totalorder %s18, 161
    %p183 = pnand %p181, %p182
    %p184 = pneg %p183
    // Predicated region
    $region29: #{tpu_custom_call.1} parent=5 // pred_check
      _
    $region30: #{tpu_custom_call.1} parent=5 // pred_check_branch
      %186 = sbr.rel (%p183) target = $region32
    $region31: #{tpu_custom_call.1} parent=5 // pred_region
      %s187 = ssub.s32 %s18, 1
      %s188 = sld [smem:[#allocation3 + %s29]]
      %s189 = sadd.s32 %s188, %s30
      %s190 = smul.u32 2, %s189
      %p191 = scmp.lt.s32.totalorder %s28, 1
      %s192 = scalar_select %p191, %s28, 1
      %p193 = scmp.lt.s32.totalorder %s190, 101
      %s194 = scalar_select %p193, %s190, 101
      %s195 = smul.addr %s192, 102
      %s196 = sadd.s32 %s194, %s195
      %s197 = smul.addr %s196, 2
      %s198 = scalar_lea.vmem %s1, %s197
      %p199 = pneg %p69
      %p200 = pneg %p66
      %p201 = pneg %p90
      %p202 = pneg %p87
      %p203 = pneg %p111
      %p204 = pneg %p108
      %p205 = pneg %p139
      %p206 = pneg %p136
      %p207 = scmp.lt.s32.totalorder %s28, 1
      %s208 = scalar_select %p207, %s28, 1
      %p209 = scmp.lt.s32.totalorder %s29, 9
      %s210 = scalar_select %p209, %s29, 9
      %s211 = smul.addr %s210, 4
      %s212 = smul.addr %s208, 40
      %s213 = sadd.s32 %s211, %s212
      %s214 = smul.addr %s213, 8
      %s215 = scalar_lea.vmem %s4, %s214
      %s216 = sld [smem:[#allocation3 + %s29]]
      %s217 = sadd.s32 %s216, %s30
      %s218 = smul.u32 2, %s217
      %p219 = scmp.lt.s32.totalorder %s28, 1
      %s220 = scalar_select %p219, %s28, 1
      %p221 = scmp.lt.s32.totalorder %s218, 101
      %s222 = scalar_select %p221, %s218, 101
      %s223 = smul.addr %s220, 102
      %s224 = sadd.s32 %s222, %s223
      %s225 = smul.addr %s224, 2
      %s226 = scalar_lea.vmem %s1, %s225
      %s227 = sld [smem:[#allocation3 + %s29]]
      %s228 = sadd.s32 %s227, %s30
      %s229 = smul.u32 2, %s228
      %p230 = scmp.lt.s32.totalorder %s28, 1
      %s231 = scalar_select %p230, %s28, 1
      %p232 = scmp.lt.s32.totalorder %s29, 9
      %s233 = scalar_select %p232, %s29, 9
      %s234 = smul.addr %s233, 4
      %s235 = smul.addr %s231, 40
      %s236 = sadd.s32 %s234, %s235
      %s237 = smul.addr %s236, 8
      %s238 = scalar_lea.vmem %s4, %s237
      %p239 = scmp.eq.s32.totalorder %s30, 0
      // Predicated region
      $region33: #{tpu_custom_call.1} parent=31 // pred_check
        %p240 = pneg %p239
      $region34: #{tpu_custom_call.1} parent=31 // pred_check_branch
        %242 = sbr.rel (%p240) target = $region36
      $region35: #{tpu_custom_call.1} parent=31 // pred_region
        %vm243 = vcmask 7168
        %244 = vst.msk [vmem:[%s238] sm:$0xff] %vm243, 0.0
        %245 = vst.msk [vmem:[%s238 + $0x8] sm:$0xff] %vm243, 0.0
        %246 = vst.msk [vmem:[%s238 + $0x10] sm:$0xff] %vm243, 0.0
        %247 = vst.msk [vmem:[%s238 + $0x18] sm:$0xff] %vm243, 0.0
      $region36: #{tpu_custom_call.1} parent=31 // pred_fallthru
        _
      %v248 = vld [vmem:[%s2] sm:$0xff]
      %v249 = vld [vmem:[%s2 + $0x8] sm:$0xff]
      %v250 = vld [vmem:[%s2 + $0x10] sm:$0xff]
      %v251 = vld [vmem:[%s2 + $0x18] sm:$0xff]
      %v252 = vld [vmem:[%s3] sm:$0xff]
      %v253 = vld [vmem:[%s3 + $0x8] sm:$0xff]
      %v254 = vld [vmem:[%s3 + $0x10] sm:$0xff]
      %v255 = vld [vmem:[%s3 + $0x18] sm:$0xff]
      %v256 = vld [vmem:[%s226] sm:$0x3]
      %v257 = vunpack.c.l.bf16 %v256
      %259 = vset.pattern.permute.xlu0 0
      %260 = vperm.xlu0 %259, %v248
      %v261 = vpop.permute.xlu0 %260
      %264 = vset.pattern.permute.xlu0 0
      %265 = vperm.xlu0 %264, %v249
      %v266 = vpop.permute.xlu0 %265
      %269 = vset.pattern.permute.xlu0 0
      %270 = vperm.xlu0 %269, %v250
      %v271 = vpop.permute.xlu0 %270
      %274 = vset.pattern.permute.xlu0 0
      %275 = vperm.xlu0 %274, %v251
      %v276 = vpop.permute.xlu0 %275
      %v278 = vperm.slane %v257, 0
      %v279 = vmul.f32 %v261, %v278
      %v280 = vmul.f32 %v266, %v278
      %v281 = vmul.f32 %v271, %v278
      %v282 = vmul.f32 %v276, %v278
      %284 = vset.pattern.permute.xlu0 0
      %285 = vperm.xlu0 %284, %v252
      %v286 = vpop.permute.xlu0 %285
      %289 = vset.pattern.permute.xlu0 0
      %290 = vperm.xlu0 %289, %v253
      %v291 = vpop.permute.xlu0 %290
      %294 = vset.pattern.permute.xlu0 0
      %295 = vperm.xlu0 %294, %v254
      %v296 = vpop.permute.xlu0 %295
      %299 = vset.pattern.permute.xlu0 0
      %300 = vperm.xlu0 %299, %v255
      %v301 = vpop.permute.xlu0 %300
      %v303 = vadd.f32 %v286, %v279
      %v304 = vadd.f32 %v291, %v280
      %v305 = vadd.f32 %v296, %v281
      %v306 = vadd.f32 %v301, %v282
      %307 = vset.pattern.permute.xlu0 1
      %308 = vperm.xlu0 %307, %v248
      %v309 = vpop.permute.xlu0 %308
      %311 = vset.pattern.permute.xlu0 1
      %312 = vperm.xlu0 %311, %v249
      %v313 = vpop.permute.xlu0 %312
      %315 = vset.pattern.permute.xlu0 1
      %316 = vperm.xlu0 %315, %v250
      %v317 = vpop.permute.xlu0 %316
      %319 = vset.pattern.permute.xlu0 1
      %320 = vperm.xlu0 %319, %v251
      %v321 = vpop.permute.xlu0 %320
      %v323 = vperm.slane %v257, 1
      %v324 = vmul.f32 %v309, %v323
      %v325 = vmul.f32 %v313, %v323
      %v326 = vmul.f32 %v317, %v323
      %v327 = vmul.f32 %v321, %v323
      %v328 = vadd.f32 %v303, %v324
      %v329 = vadd.f32 %v304, %v325
      %v330 = vadd.f32 %v305, %v326
      %v331 = vadd.f32 %v306, %v327
      %332 = vset.pattern.permute.xlu0 2
      %333 = vperm.xlu0 %332, %v248
      %v334 = vpop.permute.xlu0 %333
      %336 = vset.pattern.permute.xlu0 2
      %337 = vperm.xlu0 %336, %v249
      %v338 = vpop.permute.xlu0 %337
      %340 = vset.pattern.permute.xlu0 2
      %341 = vperm.xlu0 %340, %v250
      %v342 = vpop.permute.xlu0 %341
      %344 = vset.pattern.permute.xlu0 2
      %345 = vperm.xlu0 %344, %v251
      %v346 = vpop.permute.xlu0 %345
      %v348 = vperm.slane %v257, 2
      %v349 = vmul.f32 %v334, %v348
      %v350 = vmul.f32 %v338, %v348
      %v351 = vmul.f32 %v342, %v348
      %v352 = vmul.f32 %v346, %v348
      %v353 = vadd.f32 %v328, %v349
      %v354 = vadd.f32 %v329, %v350
      %v355 = vadd.f32 %v330, %v351
      %v356 = vadd.f32 %v331, %v352
      %v357 = vmax.f32 %v353, 0.0
      %v358 = vmax.f32 %v354, 0.0
      %v359 = vmax.f32 %v355, 0.0
      %v360 = vmax.f32 %v356, 0.0
      %vm361 = vcmask 523264
      %v362 = vsel %vm361, %v357, 0.0
      %363 = vadd.xlane.f32.xlu0 %v362
      %v364 = vpop.xlane.xlu0 %363
      %v365 = vsel %vm361, %v358, 0.0
      %366 = vadd.xlane.f32.xlu0 %v365
      %v367 = vpop.xlane.xlu0 %366
      %v368 = vsel %vm361, %v359, 0.0
      %369 = vadd.xlane.f32.xlu0 %v368
      %v370 = vpop.xlane.xlu0 %369
      %v371 = vsel %vm361, %v360, 0.0
      %372 = vadd.xlane.f32.xlu0 %v371
      %v373 = vpop.xlane.xlu0 %372
      %v374 = vadd.f32 %v364, 0.0
      %v375 = vadd.f32 %v367, 0.0
      %v376 = vadd.f32 %v370, 0.0
      %v377 = vadd.f32 %v373, 0.0
      %s378 = scalar_lea.vmem %s226, 2
      %v379 = vld [vmem:[%s378] sm:$0x3]
      %v380 = vunpack.c.l.bf16 %v379
      %v381 = vperm.slane %v380, 0
      %v382 = vmul.f32 %v261, %v381
      %v383 = vmul.f32 %v266, %v381
      %v384 = vmul.f32 %v271, %v381
      %v385 = vmul.f32 %v276, %v381
      %v386 = vadd.f32 %v286, %v382
      %v387 = vadd.f32 %v291, %v383
      %v388 = vadd.f32 %v296, %v384
      %v389 = vadd.f32 %v301, %v385
      %v390 = vperm.slane %v380, 1
      %v391 = vmul.f32 %v309, %v390
      %v392 = vmul.f32 %v313, %v390
      %v393 = vmul.f32 %v317, %v390
      %v394 = vmul.f32 %v321, %v390
      %v395 = vadd.f32 %v386, %v391
      %v396 = vadd.f32 %v387, %v392
      %v397 = vadd.f32 %v388, %v393
      %v398 = vadd.f32 %v389, %v394
      %v399 = vperm.slane %v380, 2
      %v400 = vmul.f32 %v334, %v399
      %v401 = vmul.f32 %v338, %v399
      %v402 = vmul.f32 %v342, %v399
      %v403 = vmul.f32 %v346, %v399
      %v404 = vadd.f32 %v395, %v400
      %v405 = vadd.f32 %v396, %v401
      %v406 = vadd.f32 %v397, %v402
      %v407 = vadd.f32 %v398, %v403
      %v408 = vmax.f32 %v404, 0.0
      %v409 = vmax.f32 %v405, 0.0
      %v410 = vmax.f32 %v406, 0.0
      %v411 = vmax.f32 %v407, 0.0
      %v412 = vsel %vm361, %v408, 0.0
      %413 = vadd.xlane.f32.xlu0 %v412
      %v414 = vpop.xlane.xlu0 %413
      %v415 = vsel %vm361, %v409, 0.0
      %416 = vadd.xlane.f32.xlu0 %v415
      %v417 = vpop.xlane.xlu0 %416
      %v418 = vsel %vm361, %v410, 0.0
      %419 = vadd.xlane.f32.xlu0 %v418
      %v420 = vpop.xlane.xlu0 %419
      %v421 = vsel %vm361, %v411, 0.0
      %422 = vadd.xlane.f32.xlu0 %v421
      %v423 = vpop.xlane.xlu0 %422
      %v424 = vadd.f32 %v374, %v414
      %v425 = vadd.f32 %v375, %v417
      %v426 = vadd.f32 %v376, %v420
      %v427 = vadd.f32 %v377, %v423
      %v428 = vld [vmem:[%s238] sm:$0xff]
      %v429 = vld [vmem:[%s238 + $0x8] sm:$0xff]
      %v430 = vld [vmem:[%s238 + $0x10] sm:$0xff]
      %v431 = vld [vmem:[%s238 + $0x18] sm:$0xff]
      %v432 = vadd.f32 %v428, %v424
      %v433 = vadd.f32 %v429, %v425
      %v434 = vadd.f32 %v430, %v426
      %v435 = vadd.f32 %v431, %v427
      %vm436 = vcmask 7168
      %437 = vst.msk [vmem:[%s238] sm:$0xff] %vm436, %v432
      %438 = vst.msk [vmem:[%s238 + $0x8] sm:$0xff] %vm436, %v433
      %439 = vst.msk [vmem:[%s238 + $0x10] sm:$0xff] %vm436, %v434
      %440 = vst.msk [vmem:[%s238 + $0x18] sm:$0xff] %vm436, %v435
      %p441 = scmp.eq.s32.totalorder %s30, 7
      // Predicated region
      $region37: #{tpu_custom_call.1} parent=31 // pred_check
        %p442 = pneg %p441
      $region38: #{tpu_custom_call.1} parent=31 // pred_check_branch
        %444 = sbr.rel (%p442) target = $region40
      $region39: #{tpu_custom_call.1} parent=31 // pred_region
        %v445 = vld [vmem:[%s238] sm:$0xff]
        %v446 = vld [vmem:[%s238 + $0x8] sm:$0xff]
        %v447 = vld [vmem:[%s238 + $0x10] sm:$0xff]
        %v448 = vld [vmem:[%s238 + $0x18] sm:$0xff]
        %v449 = vmul.f32 %v445, 0.0009765625
        %v450 = vmul.f32 %v446, 0.0009765625
        %v451 = vmul.f32 %v447, 0.0009765625
        %v452 = vmul.f32 %v448, 0.0009765625
        %453 = vst.msk [vmem:[%s238] sm:$0xff] %vm436, %v449
        %454 = vst.msk [vmem:[%s238 + $0x8] sm:$0xff] %vm436, %v450
        %455 = vst.msk [vmem:[%s238 + $0x10] sm:$0xff] %vm436, %v451
        %456 = vst.msk [vmem:[%s238 + $0x18] sm:$0xff] %vm436, %v452
      $region40: #{tpu_custom_call.1} parent=31 // pred_fallthru
        _
      %p457 = scmp.lt.s32.totalorder %s28, 1
      %s458 = scalar_select %p457, %s28, 1
      %p459 = scmp.lt.s32.totalorder %s29, 9
      %s460 = scalar_select %p459, %s29, 9
      %s461 = smul.addr %s460, 4
      %s462 = smul.addr %s458, 40
      %s463 = sadd.s32 %s461, %s462
      %s464 = smul.addr %s463, 8
      %s465 = scalar_lea.vmem %s4, %s464
      // Predicated region
      $region41: #{tpu_custom_call.1} parent=31 // pred_check
        %p466 = pneg %p136
      $region42: #{tpu_custom_call.1} parent=31 // pred_check_branch
        %468 = sbr.rel (%p466) target = $region44
      $region43: #{tpu_custom_call.1} parent=31 // pred_region
        _
      $region44: #{tpu_custom_call.1} parent=31 // pred_fallthru
        _
    $region32: #{tpu_custom_call.1} parent=5 // pred_fallthru
      _
    %p469 = scmp.le.s32.totalorder 2, %s18
    // Predicated region
    $region45: #{tpu_custom_call.1} parent=5 // pred_check
      %p470 = pneg %p469
    $region46: #{tpu_custom_call.1} parent=5 // pred_check_branch
      %472 = sbr.rel (%p470) target = $region48
    $region47: #{tpu_custom_call.1} parent=5 // pred_region
      %s473 = ssub.s32 %s18, 2
      // Predicated region
      $region49: #{tpu_custom_call.1} parent=47 // pred_check
        %p474 = pneg %p142
      $region50: #{tpu_custom_call.1} parent=47 // pred_check_branch
        %476 = sbr.rel (%p474) target = $region52
      $region51: #{tpu_custom_call.1} parent=47 // pred_region
        %p477 = scmp.lt.s32.totalorder %s31, 1
        %s478 = scalar_select %p477, %s31, 1
        %p479 = scmp.lt.s32.totalorder %s32, 9
        %s480 = scalar_select %p479, %s32, 9
        %s481 = smul.addr %s480, 4
        %s482 = smul.addr %s478, 40
        %s483 = sadd.s32 %s481, %s482
        %s484 = smul.addr %s483, 8
        %s485 = scalar_lea.vmem %s4, %s484
      $region52: #{tpu_custom_call.1} parent=47 // pred_fallthru
        _
    $region48: #{tpu_custom_call.1} parent=5 // pred_fallthru
      _
  $region6: #{tpu_custom_call.1} parent=0 // loop_footer
    %s22 = sadd.s32 1, %s18
  $region7: #{tpu_custom_call.1} parent=0 // loop_footer_branch
    %17 = sbr.rel target = $region3
  $region8: #{tpu_custom_call.1} parent=0 // loop_exit
    _

</llo_original>
